<compile_context>
chip_gen: v7x
topology: tpu7x:2x2x1
jax: 0.10.0
libtpu: 0.0.40
codegen_flags: <defaults>
</compile_context>

<pallas_src>
import functools

import jax
import jax.numpy as jnp
import numpy as np
from jax.experimental import pallas as pl
from jax.experimental.pallas import tpu as pltpu


def _make_kernel(feat_dim, eps):
    inv_dm1 = 1.0 / float(feat_dim - 1)   # torch.std is unbiased (divide by D-1)

    def kernel(x_ref, a2_ref, b2_ref, w_ref, b_ref, o_ref):
        x = x_ref[...]                                        # (TM, D) f32
        mean = jnp.mean(x, axis=-1, keepdims=True)            # (TM, 1)
        xc = x - mean
        var = jnp.sum(xc * xc, axis=-1, keepdims=True) * inv_dm1
        std = jnp.sqrt(var)
        y = a2_ref[...] * xc / (std + eps) + b2_ref[...]      # LayerNorm (PyTorch semantics)

        # sublayer = Linear(size, size); dropout = identity (eval mode).
        s = jnp.dot(y, w_ref[...], preferred_element_type=jnp.float32) + b_ref[...]

        o_ref[...] = x + s                                    # residual connection

    return kernel


def residual_ln_forward(x, params, *, eps=1e-6, tile_rows=128):
    """x: (batch, seq, size) f32.  Returns x + Linear(LayerNorm(x)) with PyTorch LN math."""
    B, S, D = x.shape
    N = B * S
    xf = x.reshape(N, D)

    # Pad rows to a multiple of the tile so every block is sublane/lane dense.
    TM = min(tile_rows, max(8, N))
    n_pad = (-N) % TM
    if n_pad:
        xf = jnp.pad(xf, ((0, n_pad), (0, 0)))
    n_rows = xf.shape[0]

    kernel = _make_kernel(D, eps)
    inv = lambda i: (0, 0)   # grid-invariant residents

    grid_spec = pltpu.PrefetchScalarGridSpec(
        num_scalar_prefetch=0,
        grid=(n_rows // TM,),
        in_specs=[
            pl.BlockSpec((TM, D), lambda i: (i, 0)),   # x tile
            pl.BlockSpec((1, D), inv),                 # a_2
            pl.BlockSpec((1, D), inv),                 # b_2
            pl.BlockSpec((D, D), inv),                 # sublayer weight (pre-transposed)
            pl.BlockSpec((1, D), inv),                 # sublayer bias
        ],
        out_specs=pl.BlockSpec((TM, D), lambda i: (i, 0)),
    )

    out = pl.pallas_call(
        kernel,
        out_shape=jax.ShapeDtypeStruct((n_rows, D), jnp.float32),
        grid_spec=grid_spec,
        compiler_params=pltpu.CompilerParams(dimension_semantics=("parallel",)),
    )(xf, params["a2"], params["b2"], params["w"], params["b"])

    if n_pad:
        out = out[:N]
    return out.reshape(B, S, D)


def residual_ln_forward_ref(x, params, *, eps=1e-6):
    """Pure-JAX mirror of the PyTorch module (dropout = identity)."""
    mean = jnp.mean(x, axis=-1, keepdims=True)
    std = jnp.std(x, axis=-1, keepdims=True, ddof=1)          # torch.std: unbiased
    y = params["a2"] * (x - mean) / (std + eps) + params["b2"]
    s = y @ params["w"] + params["b"]
    return x + s


def init_params(key, size):
    k1, k2 = jax.random.split(key)
    bound = 1.0 / np.sqrt(size)
    return {
        "a2": jnp.ones((1, size), jnp.float32),                                # LayerNorm.a_2
        "b2": jnp.zeros((1, size), jnp.float32),                               # LayerNorm.b_2
        "w": jax.random.uniform(k1, (size, size), jnp.float32, -bound, bound), # sublayer W^T
        "b": jax.random.uniform(k2, (1, size), jnp.float32, -bound, bound),    # sublayer bias
    }


if __name__ == "__main__":
    # Small but lane/sublane dense shapes: batch=8, seq=32, size=128.
    batch, seq, size = 8, 32, 128

    key = jax.random.PRNGKey(0)
    k_x, k_p = jax.random.split(key)
    x = jax.random.normal(k_x, (batch, seq, size), jnp.float32)
    params = init_params(k_p, size)

    run = functools.partial(residual_ln_forward, eps=1e-6, tile_rows=128)
    out = jax.jit(lambda a, p: run(a, p))(x, params)
    out = jax.block_until_ready(out)

    ref = residual_ln_forward_ref(x, params, eps=1e-6)
    np.testing.assert_allclose(np.asarray(out), np.asarray(ref), rtol=1e-5, atol=1e-5)
    assert out.shape == (batch, seq, size)

    # TODO(synk): dropout is identity (eval mode); training-mode dropout would draw a mask
    # with pltpu.prng_random_bits inside the kernel.  Arbitrary user `sublayer` callables
    # cannot be fused generically; a same-size Linear sublayer is fused here.
    print("KERNEL_OK")
</pallas_src>

<mosaic_0001>
module attributes {stable_mosaic.version = 11 : i64} {
  func.func @kernel(%arg0: i32, %arg1: memref<128x128xf32, #tpu.memory_space<vmem>>, %arg2: memref<1x128xf32, #tpu.memory_space<vmem>>, %arg3: memref<1x128xf32, #tpu.memory_space<vmem>>, %arg4: memref<128x128xf32, #tpu.memory_space<vmem>>, %arg5: memref<1x128xf32, #tpu.memory_space<vmem>>, %arg6: memref<128x128xf32, #tpu.memory_space<vmem>>) attributes {dimension_semantics = [#tpu.dimension_semantics<parallel>], iteration_bounds = array<i64: 2>, scalar_prefetch = 0 : i64, scratch_operands = 0 : i64, tpu.core_type = #tpu.core_type<tc>, window_params = [{transform_indices = @transform_0, window_bounds = array<i64: 128, 128>}, {pipeline_mode = #tpu.pipeline_mode<synchronous>, transform_indices = @transform_1, window_bounds = array<i64: 1, 128>}, {pipeline_mode = #tpu.pipeline_mode<synchronous>, transform_indices = @transform_2, window_bounds = array<i64: 1, 128>}, {pipeline_mode = #tpu.pipeline_mode<synchronous>, transform_indices = @transform_3, window_bounds = array<i64: 128, 128>}, {pipeline_mode = #tpu.pipeline_mode<synchronous>, transform_indices = @transform_4, window_bounds = array<i64: 1, 128>}, {transform_indices = @transform_5, window_bounds = array<i64: 128, 128>}]} {
    %c0 = arith.constant 0 : index
    %c0_0 = arith.constant 0 : index
    %0 = vector.load %arg1[%c0, %c0_0] : memref<128x128xf32, #tpu.memory_space<vmem>>, vector<128x128xf32>
    %cst = arith.constant dense<0.000000e+00> : vector<128xf32>
    %1 = vector.multi_reduction <add>, %0, %cst [1] : vector<128x128xf32> to vector<128xf32>
    %2 = vector.shape_cast %1 : vector<128xf32> to vector<128x1xf32>
    %cst_1 = arith.constant 1.280000e+02 : f32
    %3 = vector.broadcast %cst_1 : f32 to vector<128x1xf32>
    %4 = arith.divf %2, %3 : vector<128x1xf32>
    %5 = vector.broadcast %4 : vector<128x1xf32> to vector<128x128xf32>
    %6 = arith.subf %0, %5 : vector<128x128xf32>
    %7 = arith.mulf %6, %6 : vector<128x128xf32>
    %cst_2 = arith.constant dense<0.000000e+00> : vector<128xf32>
    %8 = vector.multi_reduction <add>, %7, %cst_2 [1] : vector<128x128xf32> to vector<128xf32>
    %9 = vector.shape_cast %8 : vector<128xf32> to vector<128x1xf32>
    %cst_3 = arith.constant 0.00787401571 : f32
    %10 = vector.broadcast %cst_3 : f32 to vector<128x1xf32>
    %11 = arith.mulf %9, %10 : vector<128x1xf32>
    %12 = math.sqrt %11 : vector<128x1xf32>
    %c0_4 = arith.constant 0 : index
    %c0_5 = arith.constant 0 : index
    %13 = vector.load %arg2[%c0_4, %c0_5] : memref<1x128xf32, #tpu.memory_space<vmem>>, vector<1x128xf32>
    %14 = vector.broadcast %13 : vector<1x128xf32> to vector<128x128xf32>
    %15 = arith.mulf %14, %6 : vector<128x128xf32>
    %cst_6 = arith.constant 9.99999997E-7 : f32
    %16 = vector.broadcast %cst_6 : f32 to vector<128x1xf32>
    %17 = arith.addf %12, %16 : vector<128x1xf32>
    %18 = vector.broadcast %17 : vector<128x1xf32> to vector<128x128xf32>
    %19 = arith.divf %15, %18 : vector<128x128xf32>
    %c0_7 = arith.constant 0 : index
    %c0_8 = arith.constant 0 : index
    %20 = vector.load %arg3[%c0_7, %c0_8] : memref<1x128xf32, #tpu.memory_space<vmem>>, vector<1x128xf32>
    %21 = vector.broadcast %20 : vector<1x128xf32> to vector<128x128xf32>
    %22 = arith.addf %19, %21 : vector<128x128xf32>
    %c0_9 = arith.constant 0 : index
    %c0_10 = arith.constant 0 : index
    %23 = vector.load %arg4[%c0_9, %c0_10] : memref<128x128xf32, #tpu.memory_space<vmem>>, vector<128x128xf32>
    %cst_11 = arith.constant dense<0.000000e+00> : vector<128x128xf32>
    %24 = tpu.matmul %22, %23, %cst_11 {dimension_numbers = #tpu.dot_dimension_numbers<[1], [0], [0], [1], [0, 0, 1, 1], [], []>} : vector<128x128xf32>, vector<128x128xf32>, vector<128x128xf32> -> vector<128x128xf32>
    %c0_12 = arith.constant 0 : index
    %c0_13 = arith.constant 0 : index
    %25 = vector.load %arg5[%c0_12, %c0_13] : memref<1x128xf32, #tpu.memory_space<vmem>>, vector<1x128xf32>
    %26 = vector.broadcast %25 : vector<1x128xf32> to vector<128x128xf32>
    %27 = arith.addf %24, %26 : vector<128x128xf32>
    %28 = arith.addf %0, %27 : vector<128x128xf32>
    %c0_14 = arith.constant 0 : index
    %c0_15 = arith.constant 0 : index
    %29 = vector.load %arg6[%c0_14, %c0_15] : memref<128x128xf32, #tpu.memory_space<vmem>>, vector<128x128xf32>
    tpu.vector_store %arg6[%c0_14, %c0_15], %28 {strides = array<i32>} : memref<128x128xf32, #tpu.memory_space<vmem>>, vector<128x128xf32>,
    return
  }
  func.func @transform_0(%arg0: i32) -> (i32, i32) {
    %c0_i32 = arith.constant 0 : i32
    %c0_i32_0 = arith.constant 0 : i32
    return %arg0, %c0_i32 : i32, i32
  }
  func.func @transform_1(%arg0: i32) -> (i32, i32) {
    %c0_i32 = arith.constant 0 : i32
    %c0_i32_0 = arith.constant 0 : i32
    %c0_i32_1 = arith.constant 0 : i32
    return %c0_i32, %c0_i32_0 : i32, i32
  }
  func.func @transform_2(%arg0: i32) -> (i32, i32) {
    %c0_i32 = arith.constant 0 : i32
    %c0_i32_0 = arith.constant 0 : i32
    %c0_i32_1 = arith.constant 0 : i32
    return %c0_i32, %c0_i32_0 : i32, i32
  }
  func.func @transform_3(%arg0: i32) -> (i32, i32) {
    %c0_i32 = arith.constant 0 : i32
    %c0_i32_0 = arith.constant 0 : i32
    %c0_i32_1 = arith.constant 0 : i32
    return %c0_i32, %c0_i32_0 : i32, i32
  }
  func.func @transform_4(%arg0: i32) -> (i32, i32) {
    %c0_i32 = arith.constant 0 : i32
    %c0_i32_0 = arith.constant 0 : i32
    %c0_i32_1 = arith.constant 0 : i32
    return %c0_i32, %c0_i32_0 : i32, i32
  }
  func.func @transform_5(%arg0: i32) -> (i32, i32) {
    %c0_i32 = arith.constant 0 : i32
    %c0_i32_0 = arith.constant 0 : i32
    return %arg0, %c0_i32 : i32, i32
  }
}

</mosaic_0001>

<llo_original>
// kernel: _lambda_.1
$region0: #{_lambda_.1}
  #allocation0 [shape = 'u32[]', space=smem, size = 0x4, offset = 0x4, fixed_abs, tag = 'smem constant byte address 0x4 - core index']
  #allocation1 [shape = 'u32[144,128]{1,0:T(1,128)}', space=vmem, size = 0x12000, scoped, tag = 'internal scratch']
  %s0 = inlined_call_operand.hbm [shape: f32[256,128], index: 0, kind: input, shape index: {}]
  %s1 = inlined_call_operand.vmem [shape: f32[1,128], index: 1, kind: input, shape index: {}]
  %s2 = inlined_call_operand.vmem [shape: f32[1,128], index: 2, kind: input, shape index: {}]
  %s3 = inlined_call_operand.hbm [shape: f32[128,128], index: 3, kind: input, shape index: {}]
  %s4 = inlined_call_operand.vmem [shape: f32[1,128], index: 4, kind: input, shape index: {}]
  %s5 = inlined_call_operand.hbm [shape: f32[256,128], index: 5, kind: output, shape index: {}]
  %s6 = sld [smem:[#allocation0]]
  $region61: #{_lambda_.1} parent=0
    _
  %s8 = ssub.s32 1, %s6
  %s9 = scalar_select 0, %s8, %s6
  $region1: #{_lambda_.1} parent=0
    #allocation2 [shape = 'u8[131072]{0}', space=vmem, size = 0x20000, scoped, tag = 'input window, operand 0']
    #allocation3 [shape = 's32[2]{0}', space=sflag, size = 0x8, scoped, tag = 'scoped memory for _lambda_.1']
    #allocation4 [shape = 's32[2]{0}', space=sflag, size = 0x8, scoped, tag = 'scoped memory for _lambda_.1']
    #allocation5 [shape = 'u8[65536]{0}', space=vmem, size = 0x10000, scoped, tag = 'input window, operand 3, single buffered']
    #allocation6 [shape = 's32[1]{0}', space=sflag, size = 0x4, scoped, tag = 'scoped memory for _lambda_.1']
    #allocation7 [shape = 'u8[131072]{0}', space=vmem, size = 0x20000, scoped, tag = 'output window, operand 0']
    %10 = vsyncpa [#allocation3], 0
    %s11 = scalar_lea.sflag [#allocation3], 1
    %12 = vsyncpa %s11, 0
    %13 = vsyncpa [#allocation6], 0
    %14 = vsyncpa [#allocation4], 0
    %s15 = scalar_lea.sflag [#allocation4], 1
    %16 = vsyncpa %s15, 0
    loop: start=0, step=1, limit=4
    $region2: #{_lambda_.1} parent=1 // loop_pre_header
      _
    $region3: #{_lambda_.1} parent=1 // loop_header
      %s18 = sphi 0, %s22
      %p19 = scmp.ge.s32.totalorder %s18, 4
      %s28 = sphi 0, %s30
      %s31 = sphi 0, %s28
      %s32 = sphi 0, %s31
      %s48 = sphi 0, %s32
      %s52 = sphi 0, %s52
      %s54 = sphi 0, %s52
      %s55 = sphi 0, %s54
      %s69 = sphi 0, %s55
      %s73 = sphi 0, %s73
      %s75 = sphi 0, %s73
      %s76 = sphi 0, %s75
      %s90 = sphi 0, %s76
      %s94 = sphi 0, %s94
      %s96 = sphi 0, %s94
      %s97 = sphi 0, %s96
      %s111 = sphi 0, %s97
      %s115 = sphi 0, %s115
      %s117 = sphi 0, %s115
      %s118 = sphi 0, %s117
      %s132 = sphi 0, %s118
      %s138 = sphi 0, %s140
      %s141 = sphi 0, %s138
      %s142 = sphi 0, %s141
      %s158 = sphi 0, %s142
    $region4: #{_lambda_.1} parent=1 // loop_header_branch
      %21 = sbr.rel (%p19) target = $region8
    $region5: #{_lambda_.1} parent=1 // loop_body
      %s23 = ssub.s32 %s18, 1
      %s24 = ssub.s32 %s18, 2
      %s25 = sadd.s32 %s18, 1
      %s26 = ssub.s32 %s18, %s25
      %p27 = scmp.eq.s32.totalorder %s26, 0
      %s29 = sadd.s32 %s28, 1
      %s30 = scalar_select %p27, %s28, %s29
      %p33 = pneg %p27
      %p34 = scmp.eq.s32.totalorder %s18, 1
      %p35 = por %p33, %p34
      %p36 = scmp.ne.s32.totalorder %s28, %s31
      %p37 = scmp.eq.s32.totalorder %s18, 0
      %p38 = por %p36, %p37
      %p39 = scmp.ne.s32.totalorder %s28, %s31
      %p40 = scmp.eq.s32.totalorder %s23, 1
      %p41 = por %p39, %p40
      %p42 = scmp.ne.s32.totalorder %s31, %s32
      %p43 = scmp.eq.s32.totalorder %s23, 0
      %p44 = por %p42, %p43
      %p45 = scmp.ne.s32.totalorder %s31, %s32
      %p46 = scmp.eq.s32.totalorder %s24, 1
      %p47 = por %p45, %p46
      %p49 = scmp.ne.s32.totalorder %s32, %s48
      %p50 = scmp.eq.s32.totalorder %s24, 0
      %p51 = por %p49, %p50
      %s53 = sadd.s32 %s52, 1
      %p56 = scmp.eq.s32.totalorder %s18, 1
      %p57 = scmp.ne.s32.totalorder %s52, %s54
      %p58 = scmp.eq.s32.totalorder %s18, 0
      %p59 = por %p57, %p58
      %p60 = scmp.ne.s32.totalorder %s52, %s54
      %p61 = scmp.eq.s32.totalorder %s23, 1
      %p62 = por %p60, %p61
      %p63 = scmp.ne.s32.totalorder %s54, %s55
      %p64 = scmp.eq.s32.totalorder %s23, 0
      %p65 = por %p63, %p64
      %p66 = scmp.ne.s32.totalorder %s54, %s55
      %p67 = scmp.eq.s32.totalorder %s24, 1
      %p68 = por %p66, %p67
      %p70 = scmp.ne.s32.totalorder %s55, %s69
      %p71 = scmp.eq.s32.totalorder %s24, 0
      %p72 = por %p70, %p71
      %s74 = sadd.s32 %s73, 1
      %p77 = scmp.eq.s32.totalorder %s18, 1
      %p78 = scmp.ne.s32.totalorder %s73, %s75
      %p79 = scmp.eq.s32.totalorder %s18, 0
      %p80 = por %p78, %p79
      %p81 = scmp.ne.s32.totalorder %s73, %s75
      %p82 = scmp.eq.s32.totalorder %s23, 1
      %p83 = por %p81, %p82
      %p84 = scmp.ne.s32.totalorder %s75, %s76
      %p85 = scmp.eq.s32.totalorder %s23, 0
      %p86 = por %p84, %p85
      %p87 = scmp.ne.s32.totalorder %s75, %s76
      %p88 = scmp.eq.s32.totalorder %s24, 1
      %p89 = por %p87, %p88
      %p91 = scmp.ne.s32.totalorder %s76, %s90
      %p92 = scmp.eq.s32.totalorder %s24, 0
      %p93 = por %p91, %p92
      %s95 = sadd.s32 %s94, 1
      %p98 = scmp.eq.s32.totalorder %s18, 1
      %p99 = scmp.ne.s32.totalorder %s94, %s96
      %p100 = scmp.eq.s32.totalorder %s18, 0
      %p101 = por %p99, %p100
      %p102 = scmp.ne.s32.totalorder %s94, %s96
      %p103 = scmp.eq.s32.totalorder %s23, 1
      %p104 = por %p102, %p103
      %p105 = scmp.ne.s32.totalorder %s96, %s97
      %p106 = scmp.eq.s32.totalorder %s23, 0
      %p107 = por %p105, %p106
      %p108 = scmp.ne.s32.totalorder %s96, %s97
      %p109 = scmp.eq.s32.totalorder %s24, 1
      %p110 = por %p108, %p109
      %p112 = scmp.ne.s32.totalorder %s97, %s111
      %p113 = scmp.eq.s32.totalorder %s24, 0
      %p114 = por %p112, %p113
      %s116 = sadd.s32 %s115, 1
      %p119 = scmp.eq.s32.totalorder %s18, 1
      %p120 = scmp.ne.s32.totalorder %s115, %s117
      %p121 = scmp.eq.s32.totalorder %s18, 0
      %p122 = por %p120, %p121
      %p123 = scmp.ne.s32.totalorder %s115, %s117
      %p124 = scmp.eq.s32.totalorder %s23, 1
      %p125 = por %p123, %p124
      %p126 = scmp.ne.s32.totalorder %s117, %s118
      %p127 = scmp.eq.s32.totalorder %s23, 0
      %p128 = por %p126, %p127
      %p129 = scmp.ne.s32.totalorder %s117, %s118
      %p130 = scmp.eq.s32.totalorder %s24, 1
      %p131 = por %p129, %p130
      %p133 = scmp.ne.s32.totalorder %s118, %s132
      %p134 = scmp.eq.s32.totalorder %s24, 0
      %p135 = por %p133, %p134
      %s136 = ssub.s32 %s18, %s25
      %p137 = scmp.eq.s32.totalorder %s136, 0
      %s139 = sadd.s32 %s138, 1
      %s140 = scalar_select %p137, %s138, %s139
      %p143 = pneg %p137
      %p144 = scmp.eq.s32.totalorder %s18, 1
      %p145 = por %p143, %p144
      %p146 = scmp.ne.s32.totalorder %s138, %s141
      %p147 = scmp.eq.s32.totalorder %s18, 0
      %p148 = por %p146, %p147
      %p149 = scmp.ne.s32.totalorder %s138, %s141
      %p150 = scmp.eq.s32.totalorder %s23, 1
      %p151 = por %p149, %p150
      %p152 = scmp.ne.s32.totalorder %s141, %s142
      %p153 = scmp.eq.s32.totalorder %s23, 0
      %p154 = por %p152, %p153
      %p155 = scmp.ne.s32.totalorder %s141, %s142
      %p156 = scmp.eq.s32.totalorder %s24, 1
      %p157 = por %p155, %p156
      %p159 = scmp.ne.s32.totalorder %s142, %s158
      %p160 = scmp.eq.s32.totalorder %s24, 0
      %p161 = por %p159, %p160
      %p162 = scmp.le.s32.totalorder 1, %s18
      %p163 = scmp.lt.s32.totalorder %s18, 3
      %p164 = pnand %p162, %p163
      %p165 = pneg %p164
      // Predicated region
      $region9: #{_lambda_.1} parent=5 // pred_check
        _
      $region10: #{_lambda_.1} parent=5 // pred_check_branch
        %167 = sbr.rel (%p164) target = $region12
      $region11: #{_lambda_.1} parent=5 // pred_region
        %s168 = ssub.s32 %s18, 1
        // Predicated region
        $region13: #{_lambda_.1} parent=11 // pred_check
          %p169 = pneg %p65
        $region14: #{_lambda_.1} parent=11 // pred_check_branch
          %171 = sbr.rel (%p169) target = $region16
        $region15: #{_lambda_.1} parent=11 // pred_region
          _
        $region16: #{_lambda_.1} parent=11 // pred_fallthru
          _
        // Predicated region
        $region17: #{_lambda_.1} parent=11 // pred_check
          %p172 = pneg %p86
        $region18: #{_lambda_.1} parent=11 // pred_check_branch
          %174 = sbr.rel (%p172) target = $region20
        $region19: #{_lambda_.1} parent=11 // pred_region
          _
        $region20: #{_lambda_.1} parent=11 // pred_fallthru
          _
        // Predicated region
        $region21: #{_lambda_.1} parent=11 // pred_check
          %p175 = pneg %p107
        $region22: #{_lambda_.1} parent=11 // pred_check_branch
          %177 = sbr.rel (%p175) target = $region24
        $region23: #{_lambda_.1} parent=11 // pred_region
          %s179 = ssub.s32 2048, 2048
          %180 = vsyncadd [#allocation6], %s179
          %s181 = sshll.u32 [#allocation5], 4
          %s182 = int_to_ptr.vmem [resolvable:$true] %s181
          %187 = dma.hbm_to_vmem [thread:$0]  %s3, 2048, %s182, [#allocation6], 128, 128, 8
        $region24: #{_lambda_.1} parent=11 // pred_fallthru
          _
        // Predicated region
        $region25: #{_lambda_.1} parent=11 // pred_check
          %p188 = pneg %p128
        $region26: #{_lambda_.1} parent=11 // pred_check_branch
          %190 = sbr.rel (%p188) target = $region28
        $region27: #{_lambda_.1} parent=11 // pred_region
          _
        $region28: #{_lambda_.1} parent=11 // pred_fallthru
          _
      $region12: #{_lambda_.1} parent=5 // pred_fallthru
        _
      %p191 = scmp.lt.s32.totalorder %s18, 2
      // Predicated region
      $region29: #{_lambda_.1} parent=5 // pred_check
        %p192 = pneg %p191
      $region30: #{_lambda_.1} parent=5 // pred_check_branch
        %194 = sbr.rel (%p192) target = $region32
      $region31: #{_lambda_.1} parent=5 // pred_region
        // Predicated region
        $region33: #{_lambda_.1} parent=31 // pred_check
          %p195 = pneg %p38
        $region34: #{_lambda_.1} parent=31 // pred_check_branch
          %197 = sbr.rel (%p195) target = $region36
        $region35: #{_lambda_.1} parent=31 // pred_region
          %s198 = sand.u32 %s28, 1
          %s199 = scalar_lea.sflag [#allocation3], %s198
          %s200 = sand.u32 %s28, 1
          %s201 = smul.addr %s200, 128
          %s202 = scalar_lea.vmem [#allocation2], %s201
          %s203 = smul.u32 16, %s18
          %s205 = ssub.s32 2048, 2048
          %206 = vsyncadd %s199, %s205
          %s207 = smul.addr %s203, 128
          %s208 = scalar_lea.hbm %s0, %s207
          %s209 = sshll.u32 %s202, 4
          %s210 = int_to_ptr.vmem [resolvable:$true] %s209
          %215 = dma.hbm_to_vmem [thread:$0]  %s208, 2048, %s210, %s199, 128, 128, 8
        $region36: #{_lambda_.1} parent=31 // pred_fallthru
          _
      $region32: #{_lambda_.1} parent=5 // pred_fallthru
        _
      %p216 = scmp.le.s32.totalorder 1, %s18
      %p217 = scmp.lt.s32.totalorder %s18, 3
      %p218 = pnand %p216, %p217
      %p219 = pneg %p218
      // Predicated region
      $region37: #{_lambda_.1} parent=5 // pred_check
        _
      $region38: #{_lambda_.1} parent=5 // pred_check_branch
        %221 = sbr.rel (%p218) target = $region40
      $region39: #{_lambda_.1} parent=5 // pred_region
        %s222 = ssub.s32 %s18, 1
        %s223 = sand.u32 %s31, 1
        %s224 = scalar_lea.sflag [#allocation3], %s223
        %s225 = sand.u32 %s31, 1
        %s226 = smul.addr %s225, 128
        %s227 = scalar_lea.vmem [#allocation2], %s226
        // Predicated region
        $region41: #{_lambda_.1} parent=39 // pred_check
          %p228 = pneg %p44
        $region42: #{_lambda_.1} parent=39 // pred_check_branch
          %230 = sbr.rel (%p228) target = $region44
        $region43: #{_lambda_.1} parent=39 // pred_region
          %231 = dma.done %s224, 2048
        $region44: #{_lambda_.1} parent=39 // pred_fallthru
          _
        // Predicated region
        $region45: #{_lambda_.1} parent=39 // pred_check
          %p232 = pneg %p107
        $region46: #{_lambda_.1} parent=39 // pred_check_branch
          %234 = sbr.rel (%p232) target = $region48
        $region47: #{_lambda_.1} parent=39 // pred_region
          %235 = dma.done [#allocation6], 2048
        $region48: #{_lambda_.1} parent=39 // pred_fallthru
          _
        %s236 = sand.u32 %s31, 1
        %s237 = scalar_lea.sflag [#allocation3], %s236
        %s238 = sand.u32 %s31, 1
        %s239 = smul.addr %s238, 128
        %s240 = scalar_lea.vmem [#allocation2], %s239
        %p241 = pneg %p44
        %p242 = pneg %p41
        %p243 = pneg %p65
        %p244 = pneg %p62
        %p245 = pneg %p86
        %p246 = pneg %p83
        %p247 = pneg %p107
        %p248 = pneg %p104
        %p249 = pneg %p128
        %p250 = pneg %p125
        %p251 = pneg %p154
        %p252 = pneg %p151
        %s253 = sand.u32 %s141, 1
        %s254 = scalar_lea.sflag [#allocation4], %s253
        %s255 = sand.u32 %s141, 1
        %s256 = smul.addr %s255, 128
        %s257 = scalar_lea.vmem [#allocation7], %s256
        %s258 = smul.u32 16, %s23
        %s259 = smul.u32 16, %s23
        %v260 = vld [vmem:[%s227] sm:$0xff]
        %v261 = vld [vmem:[%s227 + $0x8] sm:$0xff]
        %v262 = vld [vmem:[%s227 + $0x10] sm:$0xff]
        %v263 = vld [vmem:[%s227 + $0x18] sm:$0xff]
        %v264 = vld [vmem:[%s227 + $0x20] sm:$0xff]
        %v265 = vld [vmem:[%s227 + $0x28] sm:$0xff]
        %v266 = vld [vmem:[%s227 + $0x30] sm:$0xff]
        %v267 = vld [vmem:[%s227 + $0x38] sm:$0xff]
        %v268 = vld [vmem:[%s227 + $0x40] sm:$0xff]
        %v269 = vld [vmem:[%s227 + $0x48] sm:$0xff]
        %v270 = vld [vmem:[%s227 + $0x50] sm:$0xff]
        %v271 = vld [vmem:[%s227 + $0x58] sm:$0xff]
        %v272 = vld [vmem:[%s227 + $0x60] sm:$0xff]
        %v273 = vld [vmem:[%s227 + $0x68] sm:$0xff]
        %v274 = vld [vmem:[%s227 + $0x70] sm:$0xff]
        %v275 = vld [vmem:[%s227 + $0x78] sm:$0xff]
        %276 = vadd.xlane.f32.xlu0 %v260
        %v277 = vpop.xlane.xlu0 %276
        %278 = vadd.xlane.f32.xlu0 %v261
        %v279 = vpop.xlane.xlu0 %278
        %280 = vadd.xlane.f32.xlu0 %v262
        %v281 = vpop.xlane.xlu0 %280
        %282 = vadd.xlane.f32.xlu0 %v263
        %v283 = vpop.xlane.xlu0 %282
        %284 = vadd.xlane.f32.xlu0 %v264
        %v285 = vpop.xlane.xlu0 %284
        %286 = vadd.xlane.f32.xlu0 %v265
        %v287 = vpop.xlane.xlu0 %286
        %288 = vadd.xlane.f32.xlu0 %v266
        %v289 = vpop.xlane.xlu0 %288
        %290 = vadd.xlane.f32.xlu0 %v267
        %v291 = vpop.xlane.xlu0 %290
        %292 = vadd.xlane.f32.xlu0 %v268
        %v293 = vpop.xlane.xlu0 %292
        %294 = vadd.xlane.f32.xlu0 %v269
        %v295 = vpop.xlane.xlu0 %294
        %296 = vadd.xlane.f32.xlu0 %v270
        %v297 = vpop.xlane.xlu0 %296
        %298 = vadd.xlane.f32.xlu0 %v271
        %v299 = vpop.xlane.xlu0 %298
        %300 = vadd.xlane.f32.xlu0 %v272
        %v301 = vpop.xlane.xlu0 %300
        %302 = vadd.xlane.f32.xlu0 %v273
        %v303 = vpop.xlane.xlu0 %302
        %304 = vadd.xlane.f32.xlu0 %v274
        %v305 = vpop.xlane.xlu0 %304
        %306 = vadd.xlane.f32.xlu0 %v275
        %v307 = vpop.xlane.xlu0 %306
        %v308 = vrcp.pop 128.0
        %v309 = vmul.f32 %v277, %v308
        %v310 = vmul.f32 %v279, %v308
        %v311 = vmul.f32 %v281, %v308
        %v312 = vmul.f32 %v283, %v308
        %v313 = vmul.f32 %v285, %v308
        %v314 = vmul.f32 %v287, %v308
        %v315 = vmul.f32 %v289, %v308
        %v316 = vmul.f32 %v291, %v308
        %v317 = vmul.f32 %v293, %v308
        %v318 = vmul.f32 %v295, %v308
        %v319 = vmul.f32 %v297, %v308
        %v320 = vmul.f32 %v299, %v308
        %v321 = vmul.f32 %v301, %v308
        %v322 = vmul.f32 %v303, %v308
        %v323 = vmul.f32 %v305, %v308
        %v324 = vmul.f32 %v307, %v308
        %v325 = vsub.f32 %v260, %v309
        %v326 = vsub.f32 %v261, %v310
        %v327 = vsub.f32 %v262, %v311
        %v328 = vsub.f32 %v263, %v312
        %v329 = vsub.f32 %v264, %v313
        %v330 = vsub.f32 %v265, %v314
        %v331 = vsub.f32 %v266, %v315
        %v332 = vsub.f32 %v267, %v316
        %v333 = vsub.f32 %v268, %v317
        %v334 = vsub.f32 %v269, %v318
        %v335 = vsub.f32 %v270, %v319
        %v336 = vsub.f32 %v271, %v320
        %v337 = vsub.f32 %v272, %v321
        %v338 = vsub.f32 %v273, %v322
        %v339 = vsub.f32 %v274, %v323
        %v340 = vsub.f32 %v275, %v324
        %v341 = vmul.f32 %v325, %v325
        %v342 = vmul.f32 %v326, %v326
        %v343 = vmul.f32 %v327, %v327
        %v344 = vmul.f32 %v328, %v328
        %v345 = vmul.f32 %v329, %v329
        %v346 = vmul.f32 %v330, %v330
        %v347 = vmul.f32 %v331, %v331
        %v348 = vmul.f32 %v332, %v332
        %v349 = vmul.f32 %v333, %v333
        %v350 = vmul.f32 %v334, %v334
        %v351 = vmul.f32 %v335, %v335
        %v352 = vmul.f32 %v336, %v336
        %v353 = vmul.f32 %v337, %v337
        %v354 = vmul.f32 %v338, %v338
        %v355 = vmul.f32 %v339, %v339
        %v356 = vmul.f32 %v340, %v340
        %357 = vadd.xlane.f32.xlu0 %v341
        %v358 = vpop.xlane.xlu0 %357
        %359 = vadd.xlane.f32.xlu0 %v342
        %v360 = vpop.xlane.xlu0 %359
        %361 = vadd.xlane.f32.xlu0 %v343
        %v362 = vpop.xlane.xlu0 %361
        %363 = vadd.xlane.f32.xlu0 %v344
        %v364 = vpop.xlane.xlu0 %363
        %365 = vadd.xlane.f32.xlu0 %v345
        %v366 = vpop.xlane.xlu0 %365
        %367 = vadd.xlane.f32.xlu0 %v346
        %v368 = vpop.xlane.xlu0 %367
        %369 = vadd.xlane.f32.xlu0 %v347
        %v370 = vpop.xlane.xlu0 %369
        %371 = vadd.xlane.f32.xlu0 %v348
        %v372 = vpop.xlane.xlu0 %371
        %373 = vadd.xlane.f32.xlu0 %v349
        %v374 = vpop.xlane.xlu0 %373
        %375 = vadd.xlane.f32.xlu0 %v350
        %v376 = vpop.xlane.xlu0 %375
        %377 = vadd.xlane.f32.xlu0 %v351
        %v378 = vpop.xlane.xlu0 %377
        %379 = vadd.xlane.f32.xlu0 %v352
        %v380 = vpop.xlane.xlu0 %379
        %381 = vadd.xlane.f32.xlu0 %v353
        %v382 = vpop.xlane.xlu0 %381
        %383 = vadd.xlane.f32.xlu0 %v354
        %v384 = vpop.xlane.xlu0 %383
        %385 = vadd.xlane.f32.xlu0 %v355
        %v386 = vpop.xlane.xlu0 %385
        %387 = vadd.xlane.f32.xlu0 %v356
        %v388 = vpop.xlane.xlu0 %387
        %v389 = vmul.f32 %v358, 0.007874016
        %v390 = vmul.f32 %v360, 0.007874016
        %v391 = vmul.f32 %v362, 0.007874016
        %v392 = vmul.f32 %v364, 0.007874016
        %v393 = vmul.f32 %v366, 0.007874016
        %v394 = vmul.f32 %v368, 0.007874016
        %v395 = vmul.f32 %v370, 0.007874016
        %v396 = vmul.f32 %v372, 0.007874016
        %v397 = vmul.f32 %v374, 0.007874016
        %v398 = vmul.f32 %v376, 0.007874016
        %v399 = vmul.f32 %v378, 0.007874016
        %v400 = vmul.f32 %v380, 0.007874016
        %v401 = vmul.f32 %v382, 0.007874016
        %v402 = vmul.f32 %v384, 0.007874016
        %v403 = vmul.f32 %v386, 0.007874016
        %v404 = vmul.f32 %v388, 0.007874016
        %v405 = vrsqrt.pop %v389
        %v406 = vmul.f32 %v389, %v405
        %vm407 = vcmp.eq.f32.partialorder %v389, inf
        %v408 = vsel %vm407, %v389, %v406
        %vm409 = vcmp.eq.f32.partialorder %v389, 0.0
        %v410 = vand.u32 %v389, 2147483648
        %v411 = vsel %vm409, %v410, %v408
        %v412 = vrsqrt.pop %v390
        %v413 = vmul.f32 %v390, %v412
        %vm414 = vcmp.eq.f32.partialorder %v390, inf
        %v415 = vsel %vm414, %v390, %v413
        %vm416 = vcmp.eq.f32.partialorder %v390, 0.0
        %v417 = vand.u32 %v390, 2147483648
        %v418 = vsel %vm416, %v417, %v415
        %v419 = vrsqrt.pop %v391
        %v420 = vmul.f32 %v391, %v419
        %vm421 = vcmp.eq.f32.partialorder %v391, inf
        %v422 = vsel %vm421, %v391, %v420
        %vm423 = vcmp.eq.f32.partialorder %v391, 0.0
        %v424 = vand.u32 %v391, 2147483648
        %v425 = vsel %vm423, %v424, %v422
        %v426 = vrsqrt.pop %v392
        %v427 = vmul.f32 %v392, %v426
        %vm428 = vcmp.eq.f32.partialorder %v392, inf
        %v429 = vsel %vm428, %v392, %v427
        %vm430 = vcmp.eq.f32.partialorder %v392, 0.0
        %v431 = vand.u32 %v392, 2147483648
        %v432 = vsel %vm430, %v431, %v429
        %v433 = vrsqrt.pop %v393
        %v434 = vmul.f32 %v393, %v433
        %vm435 = vcmp.eq.f32.partialorder %v393, inf
        %v436 = vsel %vm435, %v393, %v434
        %vm437 = vcmp.eq.f32.partialorder %v393, 0.0
        %v438 = vand.u32 %v393, 2147483648
        %v439 = vsel %vm437, %v438, %v436
        %v440 = vrsqrt.pop %v394
        %v441 = vmul.f32 %v394, %v440
        %vm442 = vcmp.eq.f32.partialorder %v394, inf
        %v443 = vsel %vm442, %v394, %v441
        %vm444 = vcmp.eq.f32.partialorder %v394, 0.0
        %v445 = vand.u32 %v394, 2147483648
        %v446 = vsel %vm444, %v445, %v443
        %v447 = vrsqrt.pop %v395
        %v448 = vmul.f32 %v395, %v447
        %vm449 = vcmp.eq.f32.partialorder %v395, inf
        %v450 = vsel %vm449, %v395, %v448
        %vm451 = vcmp.eq.f32.partialorder %v395, 0.0
        %v452 = vand.u32 %v395, 2147483648
        %v453 = vsel %vm451, %v452, %v450
        %v454 = vrsqrt.pop %v396
        %v455 = vmul.f32 %v396, %v454
        %vm456 = vcmp.eq.f32.partialorder %v396, inf
        %v457 = vsel %vm456, %v396, %v455
        %vm458 = vcmp.eq.f32.partialorder %v396, 0.0
        %v459 = vand.u32 %v396, 2147483648
        %v460 = vsel %vm458, %v459, %v457
        %v461 = vrsqrt.pop %v397
        %v462 = vmul.f32 %v397, %v461
        %vm463 = vcmp.eq.f32.partialorder %v397, inf
        %v464 = vsel %vm463, %v397, %v462
        %vm465 = vcmp.eq.f32.partialorder %v397, 0.0
        %v466 = vand.u32 %v397, 2147483648
        %v467 = vsel %vm465, %v466, %v464
        %v468 = vrsqrt.pop %v398
        %v469 = vmul.f32 %v398, %v468
        %vm470 = vcmp.eq.f32.partialorder %v398, inf
        %v471 = vsel %vm470, %v398, %v469
        %vm472 = vcmp.eq.f32.partialorder %v398, 0.0
        %v473 = vand.u32 %v398, 2147483648
        %v474 = vsel %vm472, %v473, %v471
        %v475 = vrsqrt.pop %v399
        %v476 = vmul.f32 %v399, %v475
        %vm477 = vcmp.eq.f32.partialorder %v399, inf
        %v478 = vsel %vm477, %v399, %v476
        %vm479 = vcmp.eq.f32.partialorder %v399, 0.0
        %v480 = vand.u32 %v399, 2147483648
        %v481 = vsel %vm479, %v480, %v478
        %v482 = vrsqrt.pop %v400
        %v483 = vmul.f32 %v400, %v482
        %vm484 = vcmp.eq.f32.partialorder %v400, inf
        %v485 = vsel %vm484, %v400, %v483
        %vm486 = vcmp.eq.f32.partialorder %v400, 0.0
        %v487 = vand.u32 %v400, 2147483648
        %v488 = vsel %vm486, %v487, %v485
        %v489 = vrsqrt.pop %v401
        %v490 = vmul.f32 %v401, %v489
        %vm491 = vcmp.eq.f32.partialorder %v401, inf
        %v492 = vsel %vm491, %v401, %v490
        %vm493 = vcmp.eq.f32.partialorder %v401, 0.0
        %v494 = vand.u32 %v401, 2147483648
        %v495 = vsel %vm493, %v494, %v492
        %v496 = vrsqrt.pop %v402
        %v497 = vmul.f32 %v402, %v496
        %vm498 = vcmp.eq.f32.partialorder %v402, inf
        %v499 = vsel %vm498, %v402, %v497
        %vm500 = vcmp.eq.f32.partialorder %v402, 0.0
        %v501 = vand.u32 %v402, 2147483648
        %v502 = vsel %vm500, %v501, %v499
        %v503 = vrsqrt.pop %v403
        %v504 = vmul.f32 %v403, %v503
        %vm505 = vcmp.eq.f32.partialorder %v403, inf
        %v506 = vsel %vm505, %v403, %v504
        %vm507 = vcmp.eq.f32.partialorder %v403, 0.0
        %v508 = vand.u32 %v403, 2147483648
        %v509 = vsel %vm507, %v508, %v506
        %v510 = vrsqrt.pop %v404
        %v511 = vmul.f32 %v404, %v510
        %vm512 = vcmp.eq.f32.partialorder %v404, inf
        %v513 = vsel %vm512, %v404, %v511
        %vm514 = vcmp.eq.f32.partialorder %v404, 0.0
        %v515 = vand.u32 %v404, 2147483648
        %v516 = vsel %vm514, %v515, %v513
        %v517 = vld [vmem:[%s1] sm:$0x1]
        %v519 = vlaneseq
        %v520 = vshrl.u32 %v519, 7
        %v521 = vsub.s32 0, %v520
        %v522 = vrot.slane %v517, %v521
        %v524 = vmul.f32 %v522, %v325
        %v525 = vmul.f32 %v522, %v326
        %v526 = vmul.f32 %v522, %v327
        %v527 = vmul.f32 %v522, %v328
        %v528 = vmul.f32 %v522, %v329
        %v529 = vmul.f32 %v522, %v330
        %v530 = vmul.f32 %v522, %v331
        %v531 = vmul.f32 %v522, %v332
        %v532 = vmul.f32 %v522, %v333
        %v533 = vmul.f32 %v522, %v334
        %v534 = vmul.f32 %v522, %v335
        %v535 = vmul.f32 %v522, %v336
        %v536 = vmul.f32 %v522, %v337
        %v537 = vmul.f32 %v522, %v338
        %v538 = vmul.f32 %v522, %v339
        %v539 = vmul.f32 %v522, %v340
        %v540 = vadd.f32 %v411, 1e-06
        %v541 = vadd.f32 %v418, 1e-06
        %v542 = vadd.f32 %v425, 1e-06
        %v543 = vadd.f32 %v432, 1e-06
        %v544 = vadd.f32 %v439, 1e-06
        %v545 = vadd.f32 %v446, 1e-06
        %v546 = vadd.f32 %v453, 1e-06
        %v547 = vadd.f32 %v460, 1e-06
        %v548 = vadd.f32 %v467, 1e-06
        %v549 = vadd.f32 %v474, 1e-06
        %v550 = vadd.f32 %v481, 1e-06
        %v551 = vadd.f32 %v488, 1e-06
        %v552 = vadd.f32 %v495, 1e-06
        %v553 = vadd.f32 %v502, 1e-06
        %v554 = vadd.f32 %v509, 1e-06
        %v555 = vadd.f32 %v516, 1e-06
        %v556 = vrcp.pop %v540
        %v557 = vmul.f32 %v524, %v556
        %v558 = vrcp.pop %v541
        %v559 = vmul.f32 %v525, %v558
        %v560 = vrcp.pop %v542
        %v561 = vmul.f32 %v526, %v560
        %v562 = vrcp.pop %v543
        %v563 = vmul.f32 %v527, %v562
        %v564 = vrcp.pop %v544
        %v565 = vmul.f32 %v528, %v564
        %v566 = vrcp.pop %v545
        %v567 = vmul.f32 %v529, %v566
        %v568 = vrcp.pop %v546
        %v569 = vmul.f32 %v530, %v568
        %v570 = vrcp.pop %v547
        %v571 = vmul.f32 %v531, %v570
        %v572 = vrcp.pop %v548
        %v573 = vmul.f32 %v532, %v572
        %v574 = vrcp.pop %v549
        %v575 = vmul.f32 %v533, %v574
        %v576 = vrcp.pop %v550
        %v577 = vmul.f32 %v534, %v576
        %v578 = vrcp.pop %v551
        %v579 = vmul.f32 %v535, %v578
        %v580 = vrcp.pop %v552
        %v581 = vmul.f32 %v536, %v580
        %v582 = vrcp.pop %v553
        %v583 = vmul.f32 %v537, %v582
        %v584 = vrcp.pop %v554
        %v585 = vmul.f32 %v538, %v584
        %v586 = vrcp.pop %v555
        %v587 = vmul.f32 %v539, %v586
        %v588 = vld [vmem:[%s2] sm:$0x1]
        %v590 = vlaneseq
        %v591 = vshrl.u32 %v590, 7
        %v592 = vsub.s32 0, %v591
        %v593 = vrot.slane %v588, %v592
        %v595 = vadd.f32 %v557, %v593
        %v596 = vadd.f32 %v559, %v593
        %v597 = vadd.f32 %v561, %v593
        %v598 = vadd.f32 %v563, %v593
        %v599 = vadd.f32 %v565, %v593
        %v600 = vadd.f32 %v567, %v593
        %v601 = vadd.f32 %v569, %v593
        %v602 = vadd.f32 %v571, %v593
        %v603 = vadd.f32 %v573, %v593
        %v604 = vadd.f32 %v575, %v593
        %v605 = vadd.f32 %v577, %v593
        %v606 = vadd.f32 %v579, %v593
        %v607 = vadd.f32 %v581, %v593
        %v608 = vadd.f32 %v583, %v593
        %v609 = vadd.f32 %v585, %v593
        %v610 = vadd.f32 %v587, %v593
        %v611 = vld [vmem:[#allocation5] sm:$0xff]
        %v612 = vld [vmem:[#allocation5 + $0x8] sm:$0xff]
        %v613 = vld [vmem:[#allocation5 + $0x10] sm:$0xff]
        %v614 = vld [vmem:[#allocation5 + $0x18] sm:$0xff]
        %v615 = vld [vmem:[#allocation5 + $0x20] sm:$0xff]
        %v616 = vld [vmem:[#allocation5 + $0x28] sm:$0xff]
        %v617 = vld [vmem:[#allocation5 + $0x30] sm:$0xff]
        %v618 = vld [vmem:[#allocation5 + $0x38] sm:$0xff]
        %v619 = vld [vmem:[#allocation5 + $0x40] sm:$0xff]
        %v620 = vld [vmem:[#allocation5 + $0x48] sm:$0xff]
        %v621 = vld [vmem:[#allocation5 + $0x50] sm:$0xff]
        %v622 = vld [vmem:[#allocation5 + $0x58] sm:$0xff]
        %v623 = vld [vmem:[#allocation5 + $0x60] sm:$0xff]
        %v624 = vld [vmem:[#allocation5 + $0x68] sm:$0xff]
        %v625 = vld [vmem:[#allocation5 + $0x70] sm:$0xff]
        %v626 = vld [vmem:[#allocation5 + $0x78] sm:$0xff]
        %v627 = vld [vmem:[%s4] sm:$0x1]
        %v629 = vlaneseq
        %v630 = vshrl.u32 %v629, 7
        %v631 = vsub.s32 0, %v630
        %v632 = vrot.slane %v627, %v631
        %634 = vmatprep.subr.mxu0 0.0
        %635 = vmatpush1.msra.mxu0 %v611
        %636 = vmatprep.subr.mxu0 0.0
        %637 = vmatpush1.msra.mxu0 %v612
        %638 = vmatprep.subr.mxu0 0.0
        %639 = vmatpush1.msra.mxu0 %v613
        %640 = vmatprep.subr.mxu0 0.0
        %641 = vmatpush1.msra.mxu0 %v614
        %642 = vmatprep.subr.mxu0 0.0
        %643 = vmatpush1.msra.mxu0 %v615
        %644 = vmatprep.subr.mxu0 0.0
        %645 = vmatpush1.msra.mxu0 %v616
        %646 = vmatprep.subr.mxu0 0.0
        %647 = vmatpush1.msra.mxu0 %v617
        %648 = vmatprep.subr.mxu0 0.0
        %649 = vmatpush1.msra.mxu0 %v618
        %650 = vmatprep.subr.mxu0 0.0
        %651 = vmatpush1.msra.mxu0 %v619
        %652 = vmatprep.subr.mxu0 0.0
        %653 = vmatpush1.msra.mxu0 %v620
        %654 = vmatprep.subr.mxu0 0.0
        %655 = vmatpush1.msra.mxu0 %v621
        %656 = vmatprep.subr.mxu0 0.0
        %657 = vmatpush1.msra.mxu0 %v622
        %658 = vmatprep.subr.mxu0 0.0
        %659 = vmatpush1.msra.mxu0 %v623
        %660 = vmatprep.subr.mxu0 0.0
        %661 = vmatpush1.msra.mxu0 %v624
        %662 = vmatprep.subr.mxu0 0.0
        %663 = vmatpush1.msra.mxu0 %v625
        %664 = vmatprep.subr.mxu0 0.0
        %665 = vmatpush1.msra.mxu0 %v626
        %666 = vmatprep.subr.mxu0 0.0
        %667 = vmatpush1.msra.mxu0 0.0
        %668 = vmatprep.subr.mxu0 0.0
        %669 = vmatpush1.msra.mxu0 0.0
        %670 = vmatprep.subr.mxu0 0.0
        %671 = vmatpush1.msra.mxu0 0.0
        %672 = vmatprep.subr.mxu0 0.0
        %673 = vmatpush1.msra.mxu0 0.0
        %674 = vmatprep.subr.mxu0 0.0
        %675 = vmatpush1.msra.mxu0 0.0
        %676 = vmatprep.subr.mxu0 0.0
        %677 = vmatpush1.msra.mxu0 0.0
        %678 = vmatprep.subr.mxu0 0.0
        %679 = vmatpush1.msra.mxu0 0.0
        %680 = vmatprep.subr.mxu0 0.0
        %681 = vmatpush1.msra.mxu0 0.0
        %682 = vmatprep.subr.mxu0 0.0
        %683 = vmatpush1.msra.mxu0 0.0
        %684 = vmatprep.subr.mxu0 0.0
        %685 = vmatpush1.msra.mxu0 0.0
        %686 = vmatprep.subr.mxu0 0.0
        %687 = vmatpush1.msra.mxu0 0.0
        %688 = vmatprep.subr.mxu0 0.0
        %689 = vmatpush1.msra.mxu0 0.0
        %690 = vmatprep.subr.mxu0 0.0
        %691 = vmatpush1.msra.mxu0 0.0
        %692 = vmatprep.subr.mxu0 0.0
        %693 = vmatpush1.msra.mxu0 0.0
        %694 = vmatprep.subr.mxu0 0.0
        %695 = vmatpush1.msra.mxu0 0.0
        %696 = vmatprep.subr.mxu0 0.0
        %697 = vmatpush1.msra.mxu0 0.0
        %698 = vmatprep.mubr.f32.mxu0 0.0
        %699 = vmatmul.mubr.f32.gmra.mrb[0].mxu0 %v595
        %v700 = vpop.f32.mrb[0].mxu0
        %v701 = vadd.f32 %v632, %v700
        %v702 = vpop.f32.mrb[0].mxu0
        %703 = vmatprep.mubr.f32.mxu0 0.0
        %704 = vmatmul.mubr.f32.gmra.mrb[0].mxu0 %v596
        %v705 = vpop.f32.mrb[0].mxu0
        %v706 = vadd.f32 %v632, %v705
        %v707 = vpop.f32.mrb[0].mxu0
        %708 = vmatprep.mubr.f32.mxu0 0.0
        %709 = vmatmul.mubr.f32.gmra.mrb[0].mxu0 %v597
        %v710 = vpop.f32.mrb[0].mxu0
        %v711 = vadd.f32 %v632, %v710
        %v712 = vpop.f32.mrb[0].mxu0
        %713 = vmatprep.mubr.f32.mxu0 0.0
        %714 = vmatmul.mubr.f32.gmra.mrb[0].mxu0 %v598
        %v715 = vpop.f32.mrb[0].mxu0
        %v716 = vadd.f32 %v632, %v715
        %v717 = vpop.f32.mrb[0].mxu0
        %718 = vmatprep.mubr.f32.mxu0 0.0
        %719 = vmatmul.mubr.f32.gmra.mrb[0].mxu0 %v599
        %v720 = vpop.f32.mrb[0].mxu0
        %v721 = vadd.f32 %v632, %v720
        %v722 = vpop.f32.mrb[0].mxu0
        %723 = vmatprep.mubr.f32.mxu0 0.0
        %724 = vmatmul.mubr.f32.gmra.mrb[0].mxu0 %v600
        %v725 = vpop.f32.mrb[0].mxu0
        %v726 = vadd.f32 %v632, %v725
        %v727 = vpop.f32.mrb[0].mxu0
        %728 = vmatprep.mubr.f32.mxu0 0.0
        %729 = vmatmul.mubr.f32.gmra.mrb[0].mxu0 %v601
        %v730 = vpop.f32.mrb[0].mxu0
        %v731 = vadd.f32 %v632, %v730
        %v732 = vpop.f32.mrb[0].mxu0
        %733 = vmatprep.mubr.f32.mxu0 0.0
        %734 = vmatmul.mubr.f32.gmra.mrb[0].mxu0 %v602
        %v735 = vpop.f32.mrb[0].mxu0
        %v736 = vadd.f32 %v632, %v735
        %v737 = vpop.f32.mrb[0].mxu0
        %738 = vmatprep.mubr.f32.mxu0 0.0
        %739 = vmatmul.mubr.f32.gmra.mrb[0].mxu0 %v603
        %v740 = vpop.f32.mrb[0].mxu0
        %v741 = vadd.f32 %v632, %v740
        %v742 = vpop.f32.mrb[0].mxu0
        %743 = vmatprep.mubr.f32.mxu0 0.0
        %744 = vmatmul.mubr.f32.gmra.mrb[0].mxu0 %v604
        %v745 = vpop.f32.mrb[0].mxu0
        %v746 = vadd.f32 %v632, %v745
        %v747 = vpop.f32.mrb[0].mxu0
        %748 = vmatprep.mubr.f32.mxu0 0.0
        %749 = vmatmul.mubr.f32.gmra.mrb[0].mxu0 %v605
        %v750 = vpop.f32.mrb[0].mxu0
        %v751 = vadd.f32 %v632, %v750
        %v752 = vpop.f32.mrb[0].mxu0
        %753 = vmatprep.mubr.f32.mxu0 0.0
        %754 = vmatmul.mubr.f32.gmra.mrb[0].mxu0 %v606
        %v755 = vpop.f32.mrb[0].mxu0
        %v756 = vadd.f32 %v632, %v755
        %v757 = vpop.f32.mrb[0].mxu0
        %758 = vmatprep.mubr.f32.mxu0 0.0
        %759 = vmatmul.mubr.f32.gmra.mrb[0].mxu0 %v607
        %v760 = vpop.f32.mrb[0].mxu0
        %v761 = vadd.f32 %v632, %v760
        %v762 = vpop.f32.mrb[0].mxu0
        %763 = vmatprep.mubr.f32.mxu0 0.0
        %764 = vmatmul.mubr.f32.gmra.mrb[0].mxu0 %v608
        %v765 = vpop.f32.mrb[0].mxu0
        %v766 = vadd.f32 %v632, %v765
        %v767 = vpop.f32.mrb[0].mxu0
        %768 = vmatprep.mubr.f32.mxu0 0.0
        %769 = vmatmul.mubr.f32.gmra.mrb[0].mxu0 %v609
        %v770 = vpop.f32.mrb[0].mxu0
        %v771 = vadd.f32 %v632, %v770
        %v772 = vpop.f32.mrb[0].mxu0
        %773 = vmatprep.mubr.f32.mxu0 0.0
        %774 = vmatmul.mubr.f32.gmra.mrb[0].mxu0 %v610
        %v775 = vpop.f32.mrb[0].mxu0
        %v776 = vadd.f32 %v632, %v775
        %v777 = vpop.f32.mrb[0].mxu0
        %778 = vdwg.mxu0
        %v779 = vadd.f32 %v260, %v701
        %v780 = vadd.f32 %v261, %v706
        %v781 = vadd.f32 %v262, %v711
        %v782 = vadd.f32 %v263, %v716
        %v783 = vadd.f32 %v264, %v721
        %v784 = vadd.f32 %v265, %v726
        %v785 = vadd.f32 %v266, %v731
        %v786 = vadd.f32 %v267, %v736
        %v787 = vadd.f32 %v268, %v741
        %v788 = vadd.f32 %v269, %v746
        %v789 = vadd.f32 %v270, %v751
        %v790 = vadd.f32 %v271, %v756
        %v791 = vadd.f32 %v272, %v761
        %v792 = vadd.f32 %v273, %v766
        %v793 = vadd.f32 %v274, %v771
        %v794 = vadd.f32 %v275, %v776
        %795 = vst [vmem:[%s257] sm:$0xff] %v779
        %796 = vst [vmem:[%s257 + $0x8] sm:$0xff] %v780
        %797 = vst [vmem:[%s257 + $0x10] sm:$0xff] %v781
        %798 = vst [vmem:[%s257 + $0x18] sm:$0xff] %v782
        %799 = vst [vmem:[%s257 + $0x20] sm:$0xff] %v783
        %800 = vst [vmem:[%s257 + $0x28] sm:$0xff] %v784
        %801 = vst [vmem:[%s257 + $0x30] sm:$0xff] %v785
        %802 = vst [vmem:[%s257 + $0x38] sm:$0xff] %v786
        %803 = vst [vmem:[%s257 + $0x40] sm:$0xff] %v787
        %804 = vst [vmem:[%s257 + $0x48] sm:$0xff] %v788
        %805 = vst [vmem:[%s257 + $0x50] sm:$0xff] %v789
        %806 = vst [vmem:[%s257 + $0x58] sm:$0xff] %v790
        %807 = vst [vmem:[%s257 + $0x60] sm:$0xff] %v791
        %808 = vst [vmem:[%s257 + $0x68] sm:$0xff] %v792
        %809 = vst [vmem:[%s257 + $0x70] sm:$0xff] %v793
        %810 = vst [vmem:[%s257 + $0x78] sm:$0xff] %v794
        %s811 = sand.u32 %s141, 1
        %s812 = scalar_lea.sflag [#allocation4], %s811
        %s813 = sand.u32 %s141, 1
        %s814 = smul.addr %s813, 128
        %s815 = scalar_lea.vmem [#allocation7], %s814
        // Predicated region
        $region49: #{_lambda_.1} parent=39 // pred_check
          %p816 = pneg %p151
        $region50: #{_lambda_.1} parent=39 // pred_check_branch
          %818 = sbr.rel (%p816) target = $region52
        $region51: #{_lambda_.1} parent=39 // pred_region
          %s819 = smul.u32 16, %s23
          %s821 = ssub.s32 2048, 2048
          %822 = vsyncadd %s812, %s821
          %s823 = smul.addr %s819, 128
          %s824 = scalar_lea.hbm %s5, %s823
          %s825 = sshll.u32 %s815, 4
          %s826 = int_to_ptr.vmem [resolvable:$true] %s825
          %831 = dma.vmem_to_hbm [thread:$0]  %s826, 2048, %s824, %s812, 128, 128, 8
        $region52: #{_lambda_.1} parent=39 // pred_fallthru
          _
      $region40: #{_lambda_.1} parent=5 // pred_fallthru
        _
      %p832 = scmp.le.s32.totalorder 2, %s18
      // Predicated region
      $region53: #{_lambda_.1} parent=5 // pred_check
        %p833 = pneg %p832
      $region54: #{_lambda_.1} parent=5 // pred_check_branch
        %835 = sbr.rel (%p833) target = $region56
      $region55: #{_lambda_.1} parent=5 // pred_region
        %s836 = ssub.s32 %s18, 2
        // Predicated region
        $region57: #{_lambda_.1} parent=55 // pred_check
          %p837 = pneg %p157
        $region58: #{_lambda_.1} parent=55 // pred_check_branch
          %839 = sbr.rel (%p837) target = $region60
        $region59: #{_lambda_.1} parent=55 // pred_region
          %s840 = sand.u32 %s142, 1
          %s841 = scalar_lea.sflag [#allocation4], %s840
          %s842 = sand.u32 %s142, 1
          %s843 = smul.addr %s842, 128
          %s844 = scalar_lea.vmem [#allocation7], %s843
          %845 = dma.done %s841, 2048
        $region60: #{_lambda_.1} parent=55 // pred_fallthru
          _
      $region56: #{_lambda_.1} parent=5 // pred_fallthru
        _
    $region6: #{_lambda_.1} parent=1 // loop_footer
      %s22 = sadd.s32 1, %s18
    $region7: #{_lambda_.1} parent=1 // loop_footer_branch
      %17 = sbr.rel target = $region3
    $region8: #{_lambda_.1} parent=1 // loop_exit
      _
    %846 = vsyncpa [#allocation3], 1
    %s847 = scalar_lea.sflag [#allocation3], 1
    %848 = vsyncpa %s847, 1
    %849 = vsyncpa [#allocation6], 1
    %850 = vsyncpa [#allocation4], 1
    %s851 = scalar_lea.sflag [#allocation4], 1
    %852 = vsyncpa %s851, 1

</llo_original>
